<compile_context>
chip_gen: v6e
topology: v6e:2x2x1
jax: 0.10.0
libtpu: 0.0.40
codegen_flags: <defaults>
</compile_context>

<pallas_src>
import functools

import numpy as np
import jax
import jax.numpy as jnp
from jax.experimental import pallas as pl
from jax.experimental.pallas import tpu as pltpu


def _cdiv(a, b):
    return (a + b - 1) // b


def _round_up(x, m):
    return (x + m - 1) // m * m


# ---------------------------------------------------------------------------
# Kernel
# ---------------------------------------------------------------------------
def _tree_kernel(x_ref, w_ref, m_ref, out_ref, *, levels, chunk):
    # x_ref : [TILE_B, n_in]                   streamed batch tile
    # w_ref : [n_in, T*n_used + 1]             all trees' feature masks + one
    #                                          shared zero column (-> d == 0.5)
    # m_ref : [T*n_used + 1, levels * chunk]   fused +/-1 routing; per-level
    #                                          {0,1} offsets folded into the
    #                                          last row as 2*side
    # out   : [TILE_B, chunk]                  chunk == T * n_leaf
    feats = jnp.dot(x_ref[...], w_ref[...], preferred_element_type=jnp.float32)
    d = jax.nn.sigmoid(feats)                  # last column is exactly 0.5
    terms = jnp.dot(d, m_ref[...], preferred_element_type=jnp.float32)
    # terms[:, lvl*chunk + c] == d[node]      if the leaf's path goes left
    #                         == 1 - d[node]  if it goes right
    mu = terms[:, 0:chunk]
    for lvl in range(1, levels):               # tiny static loop, VPU only
        mu = mu * terms[:, lvl * chunk:(lvl + 1) * chunk]
    # TODO(synk): if profiling shows lane-relayout ops for these slices (chunk
    # not a multiple of 128), split m_ref into `levels` operands and do one
    # lane-0-aligned matmul per level (MXU has huge slack at these shapes).
    out_ref[...] = mu.astype(out_ref.dtype)


# ---------------------------------------------------------------------------
# Constant operands (built once on host)
# ---------------------------------------------------------------------------
def _build_fused_routing(depth, n_trees):
    """Fused routing matrix: one column per (level, tree, leaf).

    Column (lvl, t, j): +1 at tree t's level-`lvl` node on leaf j's path if the
    path goes left there, -1 if it goes right.  The last row holds 2*side so
    the constant-0.5 column of sigmoid(x @ W_aug) contributes the {0,1} offset
    (0.5 * 2*side == side).
    """
    levels = depth - 1
    n_leaf = 2 ** levels
    n_used = n_leaf - 1
    chunk = n_trees * n_leaf
    rows = n_trees * n_used + 1
    m = np.zeros((rows, levels * chunk), np.float32)
    for lvl in range(levels):
        for t in range(n_trees):
            for j in range(n_leaf):
                k = j >> (levels - lvl)             # node index within level
                s = (j >> (levels - 1 - lvl)) & 1   # branch taken (0=L, 1=R)
                node = (2 ** lvl - 1) + k           # node index within tree
                col = lvl * chunk + t * n_leaf + j
                m[t * n_used + node, col] = 1.0 if s == 0 else -1.0
                m[rows - 1, col] = 2.0 * s          # 0.5 * 2s == s
    return jnp.asarray(m)


# ---------------------------------------------------------------------------
# Tile selection (VMEM-budgeted, lane-padding aware)
# ---------------------------------------------------------------------------
def _pick_tile(B, n_in, n_w_cols, term_cols, out_cols,
               x_itemsize, out_itemsize, max_tile_b):
    try:
        phys = int(pltpu.get_tpu_info().vmem_capacity_bytes)
    except Exception:  # pragma: no cover - conservative fallback
        phys = 64 * 1024 * 1024                    # v7x-safe default
    # Scoped VMEM limit: half of physical, never size for 128 MiB.
    vmem_limit = min(phys // 2, 64 * 1024 * 1024)  # 32 MiB v7x, 64 MiB v5e/v6e

    lane = lambda c: _round_up(c, 128)             # narrow dims are lane-padded
    # Streamed x / out blocks are double-buffered by the BlockSpec pipeline.
    per_row = 2 * (lane(n_in) * x_itemsize + lane(out_cols) * out_itemsize)
    # In-kernel f32 temporaries (feats, d, terms, mu), single-buffered.
    per_row += 4 * (2 * lane(n_w_cols) + lane(term_cols) + lane(out_cols))
    # Resident operands (W_aug, M_aug), double-buffered allocation; tiny.
    resident = 2 * 4 * (n_in * lane(n_w_cols)
                        + _round_up(n_w_cols, 8) * lane(term_cols))

    budget = (vmem_limit * 3) // 4 - resident      # 25% headroom for compiler
    tb = max(8, budget // per_row)
    tb = min(tb, max_tile_b, _round_up(B, 8))
    # Keep >= 2 grid steps when the batch allows it (v7x has 2 TensorCores).
    if B >= 16:
        tb = min(tb, _round_up(_cdiv(B, 2), 8))
    tb = max(8, (tb // 8) * 8)                     # sublane-aligned
    return tb, vmem_limit


# ---------------------------------------------------------------------------
# Pallas wrappers
# ---------------------------------------------------------------------------
def _routing_pallas(x, w_aug, m_aug, levels, chunk, *, max_tile_b, stream_dtype):
    B, n_in = x.shape
    n_w_cols = w_aug.shape[1]
    term_cols = m_aug.shape[1]
    out_dtype = x.dtype

    if stream_dtype is not None:
        # Halve bytes on the dominant x stream; math downstream stays f32.
        x = x.astype(stream_dtype)
        w_aug = w_aug.astype(stream_dtype)

    x_itemsize = int(np.dtype(x.dtype).itemsize)
    out_itemsize = int(np.dtype(out_dtype).itemsize)
    tb, vmem_limit = _pick_tile(B, n_in, n_w_cols, term_cols, chunk,
                                x_itemsize, out_itemsize, max_tile_b)
    n_steps = _cdiv(B, tb)                         # ragged last block; no pad

    kernel = functools.partial(_tree_kernel, levels=levels, chunk=chunk)
    flops = 2 * B * n_w_cols * (n_in + term_cols) + B * (levels - 1) * chunk
    bytes_accessed = (B * n_in * x_itemsize
                      + B * chunk * out_itemsize
                      + n_in * n_w_cols * x_itemsize
                      + n_w_cols * term_cols * 4)

    out = pl.pallas_call(
        kernel,
        out_shape=jax.ShapeDtypeStruct((B, chunk), out_dtype),
        grid_spec=pltpu.PrefetchScalarGridSpec(
            num_scalar_prefetch=0,
            grid=(n_steps,),
            in_specs=[
                pl.BlockSpec((tb, n_in), lambda i: (i, 0)),            # stream x
                pl.BlockSpec((n_in, n_w_cols), lambda i: (0, 0)),      # resident
                pl.BlockSpec((n_w_cols, term_cols), lambda i: (0, 0)), # resident
            ],
            out_specs=pl.BlockSpec((tb, chunk), lambda i: (i, 0)),
        ),
        compiler_params=pltpu.CompilerParams(
            dimension_semantics=("parallel",),     # megacore split on v7x
            vmem_limit_bytes=int(vmem_limit),
        ),
        cost_estimate=pl.CostEstimate(
            flops=int(flops),
            transcendentals=int(B * n_w_cols),
            bytes_accessed=int(bytes_accessed)),
    )(x, w_aug, m_aug)
    return out


def forest_forward(x, feature_masks, depth, *, max_tile_b=65536,
                   stream_dtype=None):
    """Fused forest: x [B, n_in], feature_masks [T, n_in, n_used] -> [B, T, n_leaf].

    Streams x from HBM once for all T trees; for T*n_leaf >= 128 the output is
    lane-dense (unmasked full-lane stores).
    """
    assert depth >= 2, "depth must be >= 2 (depth==1 has no routing decisions)"
    B, n_in = x.shape
    T = feature_masks.shape[0]
    levels = depth - 1
    n_leaf = 2 ** levels
    n_used = n_leaf - 1
    chunk = T * n_leaf

    # [n_in, T*n_used] (tree-major columns) + one shared all-zero column whose
    # sigmoid is exactly 0.5 and carries the folded {0,1} routing offsets.
    w_sel = feature_masks.astype(jnp.float32).transpose(1, 0, 2)
    w_sel = w_sel.reshape(n_in, T * n_used)
    w_aug = jnp.concatenate([w_sel, jnp.zeros((n_in, 1), jnp.float32)], axis=1)
    m_aug = _build_fused_routing(depth, T)

    out = _routing_pallas(x, w_aug, m_aug, levels, chunk,
                          max_tile_b=max_tile_b, stream_dtype=stream_dtype)
    return out.reshape(B, T, n_leaf)


def tree_forward(x, feature_mask, depth, *, max_tile_b=65536, stream_dtype=None):
    """Pallas forward for Tree: x [B, n_in] -> route probabilities [B, n_leaf]."""
    return forest_forward(x, feature_mask[None], depth,
                          max_tile_b=max_tile_b,
                          stream_dtype=stream_dtype)[:, 0, :]


# ---------------------------------------------------------------------------
# Pure-JAX reference (transcription of the PyTorch forward)
# ---------------------------------------------------------------------------
def tree_reference(x, feature_mask, depth):
    n_leaf = 2 ** (depth - 1)
    feats = jnp.dot(x, feature_mask, precision=jax.lax.Precision.HIGHEST)
    d = jax.nn.sigmoid(feats)
    decision = jnp.stack([d, 1.0 - d], axis=2)          # [B, n_used, 2]
    B = x.shape[0]
    mu = jnp.ones((B, 1, 1), x.dtype)
    begin, end = 0, 1
    for n_layer in range(depth - 1):
        mu = jnp.repeat(mu.reshape(B, -1, 1), 2, axis=2)
        mu = mu * decision[:, begin:end, :]
        begin = end
        end = begin + 2 ** (n_layer + 1)
    return mu.reshape(B, n_leaf)


if __name__ == "__main__":
    depth = 4                     # n_leaf = 8, n_used_feature = 7
    n_in_feature = 16
    batch = 8

    n_leaf = 2 ** (depth - 1)
    n_used = n_leaf - 1
    rng = np.random.default_rng(0)
    using_idx = rng.choice(np.arange(n_in_feature), n_used, replace=False)
    feature_mask = jnp.asarray(np.eye(n_in_feature)[using_idx].T,
                               dtype=jnp.float32)

    key = jax.random.PRNGKey(0)
    x = jax.random.normal(key, (batch, n_in_feature), dtype=jnp.float32)

    mu = jax.block_until_ready(tree_forward(x, feature_mask, depth))
    mu_ref = tree_reference(x, feature_mask, depth)
    np.testing.assert_allclose(np.asarray(mu), np.asarray(mu_ref),
                               rtol=2e-2, atol=1e-2)
    # Route probabilities over leaves must sum to 1 per sample (exact algebra).
    np.testing.assert_allclose(np.asarray(mu).sum(axis=1),
                               np.ones(batch), rtol=1e-5, atol=1e-5)

    # Ragged last block (no pad copy): B=37 with a 16-row tile -> 3 grid steps.
    x2 = jax.random.normal(jax.random.PRNGKey(1), (37, n_in_feature),
                           dtype=jnp.float32)
    mu2 = jax.block_until_ready(tree_forward(x2, feature_mask, depth,
                                             max_tile_b=16))
    mu2_ref = tree_reference(x2, feature_mask, depth)
    np.testing.assert_allclose(np.asarray(mu2), np.asarray(mu2_ref),
                               rtol=2e-2, atol=1e-2)
    np.testing.assert_allclose(np.asarray(mu2).sum(axis=1),
                               np.ones(37), rtol=1e-5, atol=1e-5)

    # bf16-streamed x / W_aug (halves the dominant HBM stream); math stays f32.
    mu3 = jax.block_until_ready(tree_forward(x2, feature_mask, depth,
                                             max_tile_b=16,
                                             stream_dtype=jnp.bfloat16))
    np.testing.assert_allclose(np.asarray(mu3), np.asarray(mu2_ref),
                               rtol=5e-2, atol=2e-2)

    # Fused forest: 16 trees -> lane-dense [B, 128] output, x read once.
    n_trees = 16
    masks = []
    for _ in range(n_trees):
        idx = rng.choice(np.arange(n_in_feature), n_used, replace=False)
        masks.append(np.eye(n_in_feature)[idx].T)
    feature_masks = jnp.asarray(np.stack(masks), dtype=jnp.float32)
    x3 = jax.random.normal(jax.random.PRNGKey(2), (64, n_in_feature),
                           dtype=jnp.float32)
    mu_f = jax.block_until_ready(forest_forward(x3, feature_masks, depth))
    mu_f_ref = jnp.stack([tree_reference(x3, feature_masks[t], depth)
                          for t in range(n_trees)], axis=1)
    np.testing.assert_allclose(np.asarray(mu_f), np.asarray(mu_f_ref),
                               rtol=2e-2, atol=1e-2)
    np.testing.assert_allclose(np.asarray(mu_f).sum(axis=2),
                               np.ones((64, n_trees)), rtol=1e-5, atol=1e-5)

    print("KERNEL_OK")
</pallas_src>

<mosaic_0001>
module attributes {stable_mosaic.version = 11 : i64} {
  func.func @_tree_kernel(%arg0: i32, %arg1: memref<8x16xf32, #tpu.memory_space<vmem>>, %arg2: memref<16x8xf32, #tpu.memory_space<vmem>>, %arg3: memref<8x24xf32, #tpu.memory_space<vmem>>, %arg4: memref<8x8xf32, #tpu.memory_space<vmem>>) attributes {dimension_semantics = [#tpu.dimension_semantics<parallel>], iteration_bounds = array<i64: 1>, scalar_prefetch = 0 : i64, scratch_operands = 0 : i64, tpu.core_type = #tpu.core_type<tc>, window_params = [{transform_indices = @transform_0, window_bounds = array<i64: 8, 16>}, {pipeline_mode = #tpu.pipeline_mode<synchronous>, transform_indices = @transform_1, window_bounds = array<i64: 16, 8>}, {pipeline_mode = #tpu.pipeline_mode<synchronous>, transform_indices = @transform_2, window_bounds = array<i64: 8, 24>}, {transform_indices = @transform_3, window_bounds = array<i64: 8, 8>}]} {
    %c0 = arith.constant 0 : index
    %c0_0 = arith.constant 0 : index
    %0 = vector.load %arg1[%c0, %c0_0] : memref<8x16xf32, #tpu.memory_space<vmem>>, vector<8x16xf32>
    %c0_1 = arith.constant 0 : index
    %c0_2 = arith.constant 0 : index
    %1 = vector.load %arg2[%c0_1, %c0_2] : memref<16x8xf32, #tpu.memory_space<vmem>>, vector<16x8xf32>
    %cst = arith.constant dense<0.000000e+00> : vector<8x8xf32>
    %2 = tpu.matmul %0, %1, %cst {dimension_numbers = #tpu.dot_dimension_numbers<[1], [0], [0], [1], [0, 0, 1, 1], [], []>} : vector<8x16xf32>, vector<16x8xf32>, vector<8x8xf32> -> vector<8x8xf32>
    %3 = arith.negf %2 : vector<8x8xf32>
    %4 = math.exp %3 : vector<8x8xf32>
    %cst_3 = arith.constant 1.000000e+00 : f32
    %5 = vector.broadcast %cst_3 : f32 to vector<8x8xf32>
    %6 = arith.addf %5, %4 : vector<8x8xf32>
    %7 = arith.divf %5, %6 : vector<8x8xf32>
    %c0_4 = arith.constant 0 : index
    %c0_5 = arith.constant 0 : index
    %8 = vector.load %arg3[%c0_4, %c0_5] : memref<8x24xf32, #tpu.memory_space<vmem>>, vector<8x24xf32>
    %cst_6 = arith.constant dense<0.000000e+00> : vector<8x24xf32>
    %9 = tpu.matmul %7, %8, %cst_6 {dimension_numbers = #tpu.dot_dimension_numbers<[1], [0], [0], [1], [0, 0, 1, 1], [], []>} : vector<8x8xf32>, vector<8x24xf32>, vector<8x24xf32> -> vector<8x24xf32>
    %10 = vector.extract_strided_slice %9 {offsets = [0, 0], sizes = [8, 8], strides = [1, 1]} : vector<8x24xf32> to vector<8x8xf32>
    %11 = vector.extract_strided_slice %9 {offsets = [0, 8], sizes = [8, 8], strides = [1, 1]} : vector<8x24xf32> to vector<8x8xf32>
    %12 = arith.mulf %10, %11 : vector<8x8xf32>
    %13 = vector.extract_strided_slice %9 {offsets = [0, 16], sizes = [8, 8], strides = [1, 1]} : vector<8x24xf32> to vector<8x8xf32>
    %14 = arith.mulf %12, %13 : vector<8x8xf32>
    %c0_7 = arith.constant 0 : index
    %c0_8 = arith.constant 0 : index
    %15 = vector.load %arg4[%c0_7, %c0_8] : memref<8x8xf32, #tpu.memory_space<vmem>>, vector<8x8xf32>
    tpu.vector_store %arg4[%c0_7, %c0_8], %14 {strides = array<i32>} : memref<8x8xf32, #tpu.memory_space<vmem>>, vector<8x8xf32>,
    return
  }
  func.func @transform_0(%arg0: i32) -> (i32, i32) {
    %c0_i32 = arith.constant 0 : i32
    %c0_i32_0 = arith.constant 0 : i32
    return %arg0, %c0_i32 : i32, i32
  }
  func.func @transform_1(%arg0: i32) -> (i32, i32) {
    %c0_i32 = arith.constant 0 : i32
    %c0_i32_0 = arith.constant 0 : i32
    %c0_i32_1 = arith.constant 0 : i32
    return %c0_i32, %c0_i32_0 : i32, i32
  }
  func.func @transform_2(%arg0: i32) -> (i32, i32) {
    %c0_i32 = arith.constant 0 : i32
    %c0_i32_0 = arith.constant 0 : i32
    %c0_i32_1 = arith.constant 0 : i32
    return %c0_i32, %c0_i32_0 : i32, i32
  }
  func.func @transform_3(%arg0: i32) -> (i32, i32) {
    %c0_i32 = arith.constant 0 : i32
    %c0_i32_0 = arith.constant 0 : i32
    return %arg0, %c0_i32 : i32, i32
  }
}

</mosaic_0001>

<llo_original>
// kernel: tpu_custom_call.1
$region0: #{tpu_custom_call.1}
  #allocation0 [shape = 'u32[]', space=smem, size = 0x4, offset = 0x4, fixed_abs, tag = 'smem constant byte address 0x4 - core index']
  #allocation1 [shape = 'u32[144,128]{1,0:T(1,128)}', space=vmem, size = 0x12000, scoped, tag = 'internal scratch']
  %s0 = inlined_call_operand.vmem [shape: f32[8,16], index: 0, kind: input, shape index: {}]
  %s1 = inlined_call_operand.vmem [shape: f32[16,8], index: 1, kind: input, shape index: {}]
  %s2 = inlined_call_operand.vmem [shape: f32[8,24], index: 2, kind: input, shape index: {}]
  %s3 = inlined_call_operand.hbm [shape: f32[8,8], index: 3, kind: output, shape index: {}]
  %s4 = sld [smem:[#allocation0]]
  $region22: #{tpu_custom_call.1} parent=0
    _
  %s6 = ssub.s32 1, %s4
  %s7 = scalar_select 0, %s6, %s4
  $region1: #{tpu_custom_call.1} parent=0
    #allocation2 [shape = 'u8[4096]{0}', space=vmem, size = 0x1000, scoped, tag = 'output window, operand 0, single buffered']
    #allocation3 [shape = 's32[1]{0}', space=sflag, size = 0x4, scoped, tag = 'scoped memory for tpu_custom_call.1']
    %8 = vsyncpa [#allocation3], 0
    // Predicated region
    $region2: #{tpu_custom_call.1} parent=1 // pred_check
      _
    $region3: #{tpu_custom_call.1} parent=1 // pred_check_branch
      %10 = sbr.rel (0) target = $region5
    $region4: #{tpu_custom_call.1} parent=1 // pred_region
      _
    $region5: #{tpu_custom_call.1} parent=1 // pred_fallthru
      _
    // Predicated region
    $region6: #{tpu_custom_call.1} parent=1 // pred_check
      _
    $region7: #{tpu_custom_call.1} parent=1 // pred_check_branch
      %12 = sbr.rel (0) target = $region9
    $region8: #{tpu_custom_call.1} parent=1 // pred_region
      _
    $region9: #{tpu_custom_call.1} parent=1 // pred_fallthru
      _
    // Predicated region
    $region10: #{tpu_custom_call.1} parent=1 // pred_check
      _
    $region11: #{tpu_custom_call.1} parent=1 // pred_check_branch
      %14 = sbr.rel (0) target = $region13
    $region12: #{tpu_custom_call.1} parent=1 // pred_region
      _
    $region13: #{tpu_custom_call.1} parent=1 // pred_fallthru
      _
    %v15 = vld [vmem:[%s0] sm:$0xff]
    %v16 = vld [vmem:[%s1] sm:$0xff]
    %v17 = vld [vmem:[%s1 + $0x8] sm:$0xff]
    %vm18 = vcmask 130048
    %v20 = vsel %vm18, %v15, 0
    %22 = vmatprep.subr.mxu0 0.0
    %23 = vmatpush1.msra.mxu0 0.0
    %24 = vmatprep.subr.mxu0 0.0
    %25 = vmatpush1.msra.mxu0 0.0
    %26 = vmatprep.subr.mxu0 0.0
    %27 = vmatpush1.msra.mxu0 0.0
    %28 = vmatprep.subr.mxu0 0.0
    %29 = vmatpush1.msra.mxu0 0.0
    %30 = vmatprep.subr.mxu0 0.0
    %31 = vmatpush1.msra.mxu0 0.0
    %32 = vmatprep.subr.mxu0 0.0
    %33 = vmatpush1.msra.mxu0 0.0
    %34 = vmatprep.subr.mxu0 0.0
    %35 = vmatpush1.msra.mxu0 0.0
    %36 = vmatprep.subr.mxu0 0.0
    %37 = vmatpush1.msra.mxu0 0.0
    %38 = vmatprep.subr.mxu0 0.0
    %39 = vmatpush1.msra.mxu0 0.0
    %40 = vmatprep.subr.mxu0 0.0
    %41 = vmatpush1.msra.mxu0 0.0
    %42 = vmatprep.subr.mxu0 0.0
    %43 = vmatpush1.msra.mxu0 0.0
    %44 = vmatprep.subr.mxu0 0.0
    %45 = vmatpush1.msra.mxu0 0.0
    %46 = vmatprep.subr.mxu0 0.0
    %47 = vmatpush1.msra.mxu0 0.0
    %48 = vmatprep.subr.mxu0 0.0
    %49 = vmatpush1.msra.mxu0 0.0
    %50 = vmatprep.subr.mxu0 0.0
    %51 = vmatpush1.msra.mxu0 %v17
    %52 = vmatprep.subr.mxu0 0.0
    %53 = vmatpush1.msra.mxu0 %v16
    %54 = vmatprep.subr.mxu0 0.0
    %55 = vmatpush2.msra.mxu0 0.0
    %56 = vmatprep.subr.mxu0 0.0
    %57 = vmatpush2.msra.mxu0 0.0
    %58 = vmatprep.subr.mxu0 0.0
    %59 = vmatpush2.msra.mxu0 0.0
    %60 = vmatprep.subr.mxu0 0.0
    %61 = vmatpush2.msra.mxu0 0.0
    %62 = vmatprep.subr.mxu0 0.0
    %63 = vmatpush2.msra.mxu0 0.0
    %64 = vmatprep.subr.mxu0 0.0
    %65 = vmatpush2.msra.mxu0 0.0
    %66 = vmatprep.subr.mxu0 0.0
    %67 = vmatpush2.msra.mxu0 0.0
    %68 = vmatprep.subr.mxu0 0.0
    %69 = vmatpush2.msra.mxu0 0.0
    %70 = vmatprep.subr.mxu0 0.0
    %71 = vmatpush2.msra.mxu0 0.0
    %72 = vmatprep.subr.mxu0 0.0
    %73 = vmatpush2.msra.mxu0 0.0
    %74 = vmatprep.subr.mxu0 0.0
    %75 = vmatpush2.msra.mxu0 0.0
    %76 = vmatprep.subr.mxu0 0.0
    %77 = vmatpush2.msra.mxu0 0.0
    %78 = vmatprep.subr.mxu0 0.0
    %79 = vmatpush2.msra.mxu0 0.0
    %80 = vmatprep.subr.mxu0 0.0
    %81 = vmatpush2.msra.mxu0 0.0
    %82 = vmatprep.subr.mxu0 0.0
    %83 = vmatpush2.msra.mxu0 0.0
    %84 = vmatprep.subr.mxu0 0.0
    %85 = vmatpush2.msra.mxu0 0.0
    %86 = vmatprep.mubr.f32.mxu0 0.0
    %87 = vmatmul.mubr.f32.gmra.mxu0 %v20
    %v88 = vpop.f32.mrf.mxu0
    %v89 = vadd.f32 0.0, %v88
    %v90 = vpop.f32.mrf.mxu0
    %91 = vdwg.mxu0
    %v92 = vxor.u32 %v89, 2147483648
    %v93 = vmul.f32 %v92, 1.442695
    %v94 = vpow.pop %v93
    %v95 = vadd.f32 %v94, 1.0
    %v96 = vrcp.pop %v95
    %v97 = vmul.f32 1.0, %v96
    %v98 = vld [vmem:[%s2] sm:$0xff]
    %vm99 = vcmask 64512
    %v101 = vsel %vm99, %v97, 0
    %103 = vmatprep.subr.mxu0 0.0
    %104 = vmatpush1.msra.mxu0 0.0
    %105 = vmatprep.subr.mxu0 0.0
    %106 = vmatpush1.msra.mxu0 0.0
    %107 = vmatprep.subr.mxu0 0.0
    %108 = vmatpush1.msra.mxu0 0.0
    %109 = vmatprep.subr.mxu0 0.0
    %110 = vmatpush1.msra.mxu0 0.0
    %111 = vmatprep.subr.mxu0 0.0
    %112 = vmatpush1.msra.mxu0 0.0
    %113 = vmatprep.subr.mxu0 0.0
    %114 = vmatpush1.msra.mxu0 0.0
    %115 = vmatprep.subr.mxu0 0.0
    %116 = vmatpush1.msra.mxu0 0.0
    %117 = vmatprep.subr.mxu0 0.0
    %118 = vmatpush1.msra.mxu0 0.0
    %119 = vmatprep.subr.mxu0 0.0
    %120 = vmatpush1.msra.mxu0 0.0
    %121 = vmatprep.subr.mxu0 0.0
    %122 = vmatpush1.msra.mxu0 0.0
    %123 = vmatprep.subr.mxu0 0.0
    %124 = vmatpush1.msra.mxu0 0.0
    %125 = vmatprep.subr.mxu0 0.0
    %126 = vmatpush1.msra.mxu0 0.0
    %127 = vmatprep.subr.mxu0 0.0
    %128 = vmatpush1.msra.mxu0 0.0
    %129 = vmatprep.subr.mxu0 0.0
    %130 = vmatpush1.msra.mxu0 0.0
    %131 = vmatprep.subr.mxu0 0.0
    %132 = vmatpush1.msra.mxu0 0.0
    %133 = vmatprep.subr.mxu0 0.0
    %134 = vmatpush1.msra.mxu0 %v98
    %135 = vmatprep.subr.mxu0 0.0
    %136 = vmatpush2.msra.mxu0 0.0
    %137 = vmatprep.subr.mxu0 0.0
    %138 = vmatpush2.msra.mxu0 0.0
    %139 = vmatprep.subr.mxu0 0.0
    %140 = vmatpush2.msra.mxu0 0.0
    %141 = vmatprep.subr.mxu0 0.0
    %142 = vmatpush2.msra.mxu0 0.0
    %143 = vmatprep.subr.mxu0 0.0
    %144 = vmatpush2.msra.mxu0 0.0
    %145 = vmatprep.subr.mxu0 0.0
    %146 = vmatpush2.msra.mxu0 0.0
    %147 = vmatprep.subr.mxu0 0.0
    %148 = vmatpush2.msra.mxu0 0.0
    %149 = vmatprep.subr.mxu0 0.0
    %150 = vmatpush2.msra.mxu0 0.0
    %151 = vmatprep.subr.mxu0 0.0
    %152 = vmatpush2.msra.mxu0 0.0
    %153 = vmatprep.subr.mxu0 0.0
    %154 = vmatpush2.msra.mxu0 0.0
    %155 = vmatprep.subr.mxu0 0.0
    %156 = vmatpush2.msra.mxu0 0.0
    %157 = vmatprep.subr.mxu0 0.0
    %158 = vmatpush2.msra.mxu0 0.0
    %159 = vmatprep.subr.mxu0 0.0
    %160 = vmatpush2.msra.mxu0 0.0
    %161 = vmatprep.subr.mxu0 0.0
    %162 = vmatpush2.msra.mxu0 0.0
    %163 = vmatprep.subr.mxu0 0.0
    %164 = vmatpush2.msra.mxu0 0.0
    %165 = vmatprep.subr.mxu0 0.0
    %166 = vmatpush2.msra.mxu0 0.0
    %167 = vmatprep.mubr.f32.mxu0 0.0
    %168 = vmatmul.mubr.f32.gmra.mxu0 %v101
    %v169 = vpop.f32.mrf.mxu0
    %v170 = vadd.f32 0.0, %v169
    %v171 = vpop.f32.mrf.mxu0
    %172 = vdwg.mxu0
    %174 = vrot.lane.b32.xlu0 %v170, 120
    %v175 = vpop.permute.xlu0 %174
    %v177 = vmul.f32 %v170, %v175
    %178 = vrot.lane.b32.xlu0 %v170, 112
    %v179 = vpop.permute.xlu0 %178
    %v181 = vmul.f32 %v177, %v179
    %182 = vst.msk [vmem:[#allocation2] sm:$0xff] %vm99, %v181
    // Predicated region
    $region14: #{tpu_custom_call.1} parent=1 // pred_check
      _
    $region15: #{tpu_custom_call.1} parent=1 // pred_check_branch
      %184 = sbr.rel (0) target = $region17
    $region16: #{tpu_custom_call.1} parent=1 // pred_region
      %s186 = ssub.s32 128, 128
      %187 = vsyncadd [#allocation3], %s186
      %s189 = sshll.u32 [#allocation2], 4
      %s190 = int_to_ptr.vmem [resolvable:$true] %s189
      %192 = dma.vmem_to_hbm [thread:$0]  %s190, 128, %s3, [#allocation3]
    $region17: #{tpu_custom_call.1} parent=1 // pred_fallthru
      _
    // Predicated region
    $region18: #{tpu_custom_call.1} parent=1 // pred_check
      _
    $region19: #{tpu_custom_call.1} parent=1 // pred_check_branch
      %194 = sbr.rel (0) target = $region21
    $region20: #{tpu_custom_call.1} parent=1 // pred_region
      %195 = dma.done [#allocation3], 128
    $region21: #{tpu_custom_call.1} parent=1 // pred_fallthru
      _
    %196 = vsyncpa [#allocation3], 1

</llo_original>
